<compile_context>
chip_gen: v7x
topology: tpu7x:2x2x1
jax: 0.10.0
libtpu: 0.0.40
codegen_flags: <defaults>
</compile_context>

<pallas_src>
import jax
import jax.numpy as jnp
from jax.experimental import pallas as pl
from jax.experimental.pallas import tpu as pltpu

LANE = 128           # vreg lane width (last dim)
MAX_TILE_ROWS = 512  # rows per grid step (256 KiB f32 tile -> ~85% HBM roofline)


def _fused_loss_kernel(v_ref, t_ref, w_ref, acc_ref):
    """acc += w * (t - v)^2, accumulated across all grid steps (VPU only)."""
    @pl.when(pl.program_id(0) == 0)
    def _():
        acc_ref[...] = jnp.zeros_like(acc_ref)

    v = v_ref[...].astype(jnp.float32)      # (TILE, 128)
    d = t_ref[...] - v                      # (TILE, 1) broadcast -> (TILE, 128)
    acc_ref[...] += w_ref[...] * (d * d)    # per-row 1/N folded into weight


def _round_up(x, m):
    return -(-x // m) * m


def discriminator_loss(mpd_gen_out, msd_gen_out, mpd_real_out, msd_real_out):
    """JAX/Pallas equivalent of DiscriminatorLoss.forward (LSGAN D-loss)."""
    pairs = list(zip(mpd_real_out, mpd_gen_out)) + list(zip(msd_real_out, msd_gen_out))
    if not pairs:
        return jnp.float32(0.0)

    all_tensors = [x for pair in pairs for x in pair]
    slab_dtype = jnp.result_type(*all_tensors)
    if not jnp.issubdtype(slab_dtype, jnp.floating):
        slab_dtype = jnp.float32
    # Sublane alignment for packed dtypes (f32 -> 8, bf16 -> 16).
    sublane_align = 8 * max(1, 4 // jnp.dtype(slab_dtype).itemsize)

    v_blocks, t_rows, w_rows = [], [], []

    def add_tensor(x, target):
        n = x.size
        rows = -(-n // LANE)
        flat = x.reshape(-1).astype(slab_dtype)
        # Pad tail with the target value so (target - pad)^2 == 0.
        flat = jnp.pad(flat, (0, rows * LANE - n), constant_values=target)
        v_blocks.append(flat.reshape(rows, LANE))
        t_rows.append(jnp.full((rows, 1), target, jnp.float32))
        w_rows.append(jnp.full((rows, 1), 1.0 / n, jnp.float32))

    for dr, dg in pairs:
        add_tensor(dr, 1.0)   # contributes mean((1 - dr)^2)
        add_tensor(dg, 0.0)   # contributes mean(dg^2)

    total_rows = sum(b.shape[0] for b in v_blocks)
    tile_rows = min(MAX_TILE_ROWS, _round_up(total_rows, sublane_align))
    padded_rows = _round_up(total_rows, tile_rows)

    v = jnp.concatenate(v_blocks, axis=0)
    t = jnp.concatenate(t_rows, axis=0)
    w = jnp.concatenate(w_rows, axis=0)
    if padded_rows > total_rows:
        extra = padded_rows - total_rows
        v = jnp.pad(v, ((0, extra), (0, 0)))            # value irrelevant: w == 0
        t = jnp.pad(t, ((0, extra), (0, 0)))
        w = jnp.pad(w, ((0, extra), (0, 0)))            # zero weight -> no contribution

    grid = (padded_rows // tile_rows,)
    acc = pl.pallas_call(
        _fused_loss_kernel,
        out_shape=jax.ShapeDtypeStruct((tile_rows, LANE), jnp.float32),
        grid_spec=pltpu.PrefetchScalarGridSpec(
            num_scalar_prefetch=0,
            grid=grid,
            in_specs=[pl.BlockSpec((tile_rows, LANE), lambda i: (i, 0)),
                      pl.BlockSpec((tile_rows, 1), lambda i: (i, 0)),
                      pl.BlockSpec((tile_rows, 1), lambda i: (i, 0))],
            out_specs=pl.BlockSpec((tile_rows, LANE), lambda i: (0, 0)),
        ),
        compiler_params=pltpu.CompilerParams(
            dimension_semantics=("arbitrary",)),
    )(v, t, w)

    # Single cheap cross-lane/row reduce of the lane-dense accumulator.
    return jnp.sum(acc)


def _reference_loss(mpd_gen_out, msd_gen_out, mpd_real_out, msd_real_out):
    loss = jnp.float32(0.0)
    for dr, dg in list(zip(mpd_real_out, mpd_gen_out)) + list(zip(msd_real_out, msd_gen_out)):
        dr = dr.astype(jnp.float32)
        dg = dg.astype(jnp.float32)
        loss = loss + jnp.mean((1.0 - dr) ** 2) + jnp.mean(dg ** 2)
    return loss


if __name__ == "__main__":
    key = jax.random.PRNGKey(0)

    # Synthetic discriminator outputs (small shapes).
    # MPD: 5 period discriminators, outputs shaped (B, C, T//p, p).
    mpd_shapes = [(2, 1, 8, 2), (2, 1, 6, 3), (2, 1, 4, 5), (2, 1, 3, 7), (2, 1, 2, 11)]
    # MSD: 3 scale discriminators, outputs shaped (B, C, T).
    msd_shapes = [(2, 1, 64), (2, 1, 32), (2, 1, 16)]

    keys = jax.random.split(key, 2 * (len(mpd_shapes) + len(msd_shapes)))
    ki = iter(range(len(keys)))

    mpd_gen_out = [jax.random.normal(keys[next(ki)], s, jnp.float32) for s in mpd_shapes]
    mpd_real_out = [jax.random.normal(keys[next(ki)], s, jnp.float32) for s in mpd_shapes]
    msd_gen_out = [jax.random.normal(keys[next(ki)], s, jnp.float32) for s in msd_shapes]
    msd_real_out = [jax.random.normal(keys[next(ki)], s, jnp.float32) for s in msd_shapes]

    loss = discriminator_loss(mpd_gen_out, msd_gen_out, mpd_real_out, msd_real_out)
    loss = jax.block_until_ready(loss)

    ref = jax.block_until_ready(
        _reference_loss(mpd_gen_out, msd_gen_out, mpd_real_out, msd_real_out))
    assert jnp.allclose(loss, ref, rtol=1e-5, atol=1e-5), (loss, ref)

    print("KERNEL_OK")
</pallas_src>

<mosaic_0001>
module attributes {stable_mosaic.version = 11 : i64} {
  func.func @_fused_loss_kernel(%arg0: i32, %arg1: memref<16x128xf32, #tpu.memory_space<vmem>>, %arg2: memref<16x1xf32, #tpu.memory_space<vmem>>, %arg3: memref<16x1xf32, #tpu.memory_space<vmem>>, %arg4: memref<16x128xf32, #tpu.memory_space<vmem>>) attributes {dimension_semantics = [#tpu.dimension_semantics<arbitrary>], iteration_bounds = array<i64: 1>, scalar_prefetch = 0 : i64, scratch_operands = 0 : i64, tpu.core_type = #tpu.core_type<tc>, window_params = [{transform_indices = @transform_0, window_bounds = array<i64: 16, 128>}, {transform_indices = @transform_1, window_bounds = array<i64: 16, 1>}, {transform_indices = @transform_2, window_bounds = array<i64: 16, 1>}, {pipeline_mode = #tpu.pipeline_mode<synchronous>, transform_indices = @transform_3, window_bounds = array<i64: 16, 128>}]} {
    %c0_i32 = arith.constant 0 : i32
    %0 = arith.cmpi eq, %arg0, %c0_i32 : i32
    %1 = arith.extui %0 : i1 to i32
    %c0_i32_0 = arith.constant 0 : i32
    %2 = arith.cmpi ne, %1, %c0_i32_0 : i32
    scf.if %2 {
      %cst = arith.constant 0.000000e+00 : f32
      %14 = vector.broadcast %cst : f32 to vector<16x128xf32>
      %c0_10 = arith.constant 0 : index
      %c0_11 = arith.constant 0 : index
      %15 = vector.load %arg4[%c0_10, %c0_11] : memref<16x128xf32, #tpu.memory_space<vmem>>, vector<16x128xf32>
      tpu.vector_store %arg4[%c0_10, %c0_11], %14 {strides = array<i32>} : memref<16x128xf32, #tpu.memory_space<vmem>>, vector<16x128xf32>,
    } else {
    }
    %c0 = arith.constant 0 : index
    %c0_1 = arith.constant 0 : index
    %3 = vector.load %arg1[%c0, %c0_1] : memref<16x128xf32, #tpu.memory_space<vmem>>, vector<16x128xf32>
    %c0_2 = arith.constant 0 : index
    %c0_3 = arith.constant 0 : index
    %4 = vector.load %arg2[%c0_2, %c0_3] : memref<16x1xf32, #tpu.memory_space<vmem>>, vector<16x1xf32>
    %5 = vector.broadcast %4 : vector<16x1xf32> to vector<16x128xf32>
    %6 = arith.subf %5, %3 : vector<16x128xf32>
    %c0_4 = arith.constant 0 : index
    %c0_5 = arith.constant 0 : index
    %7 = vector.load %arg4[%c0_4, %c0_5] : memref<16x128xf32, #tpu.memory_space<vmem>>, vector<16x128xf32>
    %c0_6 = arith.constant 0 : index
    %c0_7 = arith.constant 0 : index
    %8 = vector.load %arg3[%c0_6, %c0_7] : memref<16x1xf32, #tpu.memory_space<vmem>>, vector<16x1xf32>
    %9 = arith.mulf %6, %6 : vector<16x128xf32>
    %10 = vector.broadcast %8 : vector<16x1xf32> to vector<16x128xf32>
    %11 = arith.mulf %10, %9 : vector<16x128xf32>
    %12 = arith.addf %7, %11 : vector<16x128xf32>
    %c0_8 = arith.constant 0 : index
    %c0_9 = arith.constant 0 : index
    %13 = vector.load %arg4[%c0_8, %c0_9] : memref<16x128xf32, #tpu.memory_space<vmem>>, vector<16x128xf32>
    tpu.vector_store %arg4[%c0_8, %c0_9], %12 {strides = array<i32>} : memref<16x128xf32, #tpu.memory_space<vmem>>, vector<16x128xf32>,
    return
  }
  func.func @transform_0(%arg0: i32) -> (i32, i32) {
    %c0_i32 = arith.constant 0 : i32
    %c0_i32_0 = arith.constant 0 : i32
    return %arg0, %c0_i32 : i32, i32
  }
  func.func @transform_1(%arg0: i32) -> (i32, i32) {
    %c0_i32 = arith.constant 0 : i32
    %c0_i32_0 = arith.constant 0 : i32
    return %arg0, %c0_i32 : i32, i32
  }
  func.func @transform_2(%arg0: i32) -> (i32, i32) {
    %c0_i32 = arith.constant 0 : i32
    %c0_i32_0 = arith.constant 0 : i32
    return %arg0, %c0_i32 : i32, i32
  }
  func.func @transform_3(%arg0: i32) -> (i32, i32) {
    %c0_i32 = arith.constant 0 : i32
    %c0_i32_0 = arith.constant 0 : i32
    %c0_i32_1 = arith.constant 0 : i32
    return %c0_i32, %c0_i32_0 : i32, i32
  }
}

</mosaic_0001>

<llo_original>
// kernel: tpu_custom_call.1
$region0: #{tpu_custom_call.1}
  #allocation0 [shape = 'u32[]', space=smem, size = 0x4, offset = 0x4, fixed_abs, tag = 'smem constant byte address 0x4 - core index']
  #allocation1 [shape = 'u32[144,128]{1,0:T(1,128)}', space=vmem, size = 0x12000, scoped, tag = 'internal scratch']
  %s0 = inlined_call_operand.vmem [shape: f32[16,128], index: 0, kind: input, shape index: {}]
  %s1 = inlined_call_operand.vmem [shape: f32[16,1], index: 1, kind: input, shape index: {}]
  %s2 = inlined_call_operand.vmem [shape: f32[16,1], index: 2, kind: input, shape index: {}]
  %s3 = inlined_call_operand.hbm [shape: f32[16,128], index: 3, kind: output, shape index: {}]
  %s4 = sld [smem:[#allocation0]]
  $region26: #{tpu_custom_call.1} parent=0
    _
  %s6 = ssub.s32 1, %s4
  %s7 = scalar_select 0, %s6, %s4
  $region1: #{tpu_custom_call.1} parent=0
    #allocation2 [shape = 'u8[8192]{0}', space=vmem, size = 0x2000, scoped, tag = 'output window, operand 0, single buffered']
    #allocation3 [shape = 's32[1]{0}', space=sflag, size = 0x4, scoped, tag = 'scoped memory for tpu_custom_call.1']
    %8 = vsyncpa [#allocation3], 0
    // Predicated region
    $region2: #{tpu_custom_call.1} parent=1 // pred_check
      _
    $region3: #{tpu_custom_call.1} parent=1 // pred_check_branch
      %10 = sbr.rel (0) target = $region5
    $region4: #{tpu_custom_call.1} parent=1 // pred_region
      _
    $region5: #{tpu_custom_call.1} parent=1 // pred_fallthru
      _
    // Predicated region
    $region6: #{tpu_custom_call.1} parent=1 // pred_check
      _
    $region7: #{tpu_custom_call.1} parent=1 // pred_check_branch
      %12 = sbr.rel (0) target = $region9
    $region8: #{tpu_custom_call.1} parent=1 // pred_region
      _
    $region9: #{tpu_custom_call.1} parent=1 // pred_fallthru
      _
    // Predicated region
    $region10: #{tpu_custom_call.1} parent=1 // pred_check
      _
    $region11: #{tpu_custom_call.1} parent=1 // pred_check_branch
      %14 = sbr.rel (0) target = $region13
    $region12: #{tpu_custom_call.1} parent=1 // pred_region
      _
    $region13: #{tpu_custom_call.1} parent=1 // pred_fallthru
      _
    %p15 = scmp.eq.s32.totalorder 0, 0
    // Predicated region
    $region14: #{tpu_custom_call.1} parent=1 // pred_check
      %p16 = pneg %p15
    $region15: #{tpu_custom_call.1} parent=1 // pred_check_branch
      %18 = sbr.rel (%p16) target = $region17
    $region16: #{tpu_custom_call.1} parent=1 // pred_region
      %19 = vst [vmem:[#allocation2] sm:$0xff] 0.0
      %20 = vst [vmem:[#allocation2 + $0x8] sm:$0xff] 0.0
    $region17: #{tpu_custom_call.1} parent=1 // pred_fallthru
      _
    %v21 = vld [vmem:[%s0] sm:$0xff]
    %v22 = vld [vmem:[%s0 + $0x8] sm:$0xff]
    %v23 = vld [vmem:[%s1] sm:$0xff]
    %v24 = vld [vmem:[%s1 + $0x8] sm:$0xff]
    %26 = vset.pattern.permute.xlu0 0
    %27 = vperm.xlu0 %26, %v23
    %v28 = vpop.permute.xlu0 %27
    %31 = vset.pattern.permute.xlu0 0
    %32 = vperm.xlu0 %31, %v24
    %v33 = vpop.permute.xlu0 %32
    %v35 = vsub.f32 %v28, %v21
    %v36 = vsub.f32 %v33, %v22
    %v37 = vld [vmem:[#allocation2] sm:$0xff]
    %v38 = vld [vmem:[#allocation2 + $0x8] sm:$0xff]
    %v39 = vld [vmem:[%s2] sm:$0xff]
    %v40 = vld [vmem:[%s2 + $0x8] sm:$0xff]
    %v41 = vmul.f32 %v35, %v35
    %v42 = vmul.f32 %v36, %v36
    %44 = vset.pattern.permute.xlu0 0
    %45 = vperm.xlu0 %44, %v39
    %v46 = vpop.permute.xlu0 %45
    %49 = vset.pattern.permute.xlu0 0
    %50 = vperm.xlu0 %49, %v40
    %v51 = vpop.permute.xlu0 %50
    %v53 = vmul.f32 %v46, %v41
    %v54 = vmul.f32 %v51, %v42
    %v55 = vadd.f32 %v37, %v53
    %v56 = vadd.f32 %v38, %v54
    %57 = vst [vmem:[#allocation2] sm:$0xff] %v55
    %58 = vst [vmem:[#allocation2 + $0x8] sm:$0xff] %v56
    // Predicated region
    $region18: #{tpu_custom_call.1} parent=1 // pred_check
      _
    $region19: #{tpu_custom_call.1} parent=1 // pred_check_branch
      %60 = sbr.rel (0) target = $region21
    $region20: #{tpu_custom_call.1} parent=1 // pred_region
      %s62 = ssub.s32 256, 256
      %63 = vsyncadd [#allocation3], %s62
      %s64 = sshll.u32 [#allocation2], 4
      %s65 = int_to_ptr.vmem [resolvable:$true] %s64
      %70 = dma.vmem_to_hbm [thread:$0]  %s65, 256, %s3, [#allocation3], 128, 128, 8
    $region21: #{tpu_custom_call.1} parent=1 // pred_fallthru
      _
    // Predicated region
    $region22: #{tpu_custom_call.1} parent=1 // pred_check
      _
    $region23: #{tpu_custom_call.1} parent=1 // pred_check_branch
      %72 = sbr.rel (0) target = $region25
    $region24: #{tpu_custom_call.1} parent=1 // pred_region
      %73 = dma.done [#allocation3], 256
    $region25: #{tpu_custom_call.1} parent=1 // pred_fallthru
      _
    %74 = vsyncpa [#allocation3], 1

</llo_original>
